<compile_context>
chip_gen: v5e
topology: v5e:2x2
jax: 0.10.0
libtpu: 0.0.40
codegen_flags: <defaults>
</compile_context>

<pallas_src>
import functools

import jax
import jax.numpy as jnp
from jax.experimental import pallas as pl
from jax.experimental.pallas import tpu as pltpu


# --------------------------------------------------------------------------- VMEM budget

def _vmem_budget():
    """Generation-aware VMEM sizing.

    Scoped limit = half the physical VMEM (32 MiB on v7x's 64 MiB parts,
    64 MiB on v5e/v6e's 128 MiB parts).  The streaming budget leaves 25%
    headroom for compiler-internal scratch / regalloc slack.
    """
    try:
        cap = int(pltpu.get_tpu_info().vmem_capacity_bytes)
    except Exception:
        cap = 64 * 1024 * 1024          # conservative default (v7x per-TC VMEM)
    limit = min(cap // 2, 96 * 1024 * 1024)
    budget = (limit * 3) // 4
    return limit, budget


# --------------------------------------------------------------------------- tile planning

def _largest_divisor_at_most(n, cap):
    cap = max(int(cap), 1)
    best, i = 1, 1
    while i * i <= n:
        if n % i == 0:
            for d in (i, n // i):
                if d <= cap and d > best:
                    best = d
        i += 1
    return best


def _plan_tiles(rows, per_row_bytes, resident_bytes, mult, budget_bytes, max_tile=8192):
    """Pick (tile_rows, rows_padded).

    Prefers a tile that divides `rows` exactly so the wrapper never needs the
    jnp.pad / out[:rows] copies (those re-stream the whole activation through
    HBM - up to ~2x traffic on a purely memory-bound op).  The tile is capped so
    that (a) the per-step working set — double-buffered I/O streams + f32 body
    temporaries + resident params — fits the VMEM budget, and (b) the grid keeps
    >= 2 steps so both v7x TensorCores get work (harmless on v5e/v6e).
    """
    avail = max(budget_bytes - resident_bytes, per_row_bytes)
    cap = int(avail // per_row_bytes)
    cap = min(cap, max_tile, rows)
    if rows >= 2 * mult:                       # keep >=2 grid steps (dual-TC v7x)
        cap = min(cap, rows // 2)
    cap = max((cap // mult) * mult, mult)

    if rows % mult == 0:
        k = _largest_divisor_at_most(rows // mult, cap // mult)
        t = k * mult
        # accept the exact-divisor tile unless it is pathologically small vs the cap
        if 8 * t >= cap or t >= 1024:
            return t, rows                     # divides rows -> no pad / no slice
    # Fallback (rare ragged row counts): pad the tail tile in the wrapper.
    rows_p = pl.cdiv(rows, cap) * cap
    return cap, rows_p


def _pad_rows(arr2d, rows_padded):
    rows = arr2d.shape[0]
    if rows_padded == rows:
        return arr2d
    return jnp.pad(arr2d, ((0, rows_padded - rows), (0, 0)))


# --------------------------------------------------------------------------- kernels

def _layernorm_postadd(y, a, b, eps, feat, out_dtype):
    """Shared LN math: a * (y - mean) / (std_unbiased + eps) + b, in f32."""
    mean = jnp.mean(y, axis=-1, keepdims=True)
    diff = y - mean
    # torch.Tensor.std(-1, keepdim=True) is UNBIASED -> divide by (N - 1).
    var_unbiased = jnp.sum(diff * diff, axis=-1, keepdims=True) * jnp.float32(1.0 / (feat - 1))
    std = jnp.sqrt(var_unbiased)
    # Per-row reciprocal (exact, tiny column) instead of a full-tile divide.
    inv = pl.reciprocal(std + jnp.float32(eps))
    return ((diff * inv) * a + b).astype(out_dtype)


def _resid_ln_kernel(x_ref, sub_ref, a_ref, b_ref, o_ref, *, eps, feat):
    """General path: sublayer(x) precomputed; fuse residual add + LayerNorm."""
    x = x_ref[...].astype(jnp.float32)
    s = sub_ref[...].astype(jnp.float32)
    # TODO(synk): nn.Dropout is identity at inference; training-mode RNG dropout
    # (pltpu.prng_seed / prng_random_bits) is intentionally not applied here.
    y = x + s
    a = a_ref[...].astype(jnp.float32)
    b = b_ref[...].astype(jnp.float32)
    o_ref[...] = _layernorm_postadd(y, a, b, eps, feat, o_ref.dtype)


def _fused_linear_resid_ln_kernel(x_ref, w_ref, bias_ref, a_ref, b_ref, o_ref, *, eps, feat):
    """Fused path: sublayer is a linear layer -> run it on the MXU inside the kernel.

    The matmul runs in bf16 (bf16-native MXU on v6e/v7x) with f32 accumulation;
    the residual add and LayerNorm stay in f32.
    """
    x = x_ref[...].astype(jnp.float32)
    s = jnp.dot(x_ref[...].astype(jnp.bfloat16), w_ref[...],
                preferred_element_type=jnp.float32)
    s = s + bias_ref[...].astype(jnp.float32)
    # TODO(synk): dropout identity (inference mode).
    y = x + s
    a = a_ref[...].astype(jnp.float32)
    b = b_ref[...].astype(jnp.float32)
    o_ref[...] = _layernorm_postadd(y, a, b, eps, feat, o_ref.dtype)


# --------------------------------------------------------------------------- wrappers

def sublayer_connection(x, sublayer_out, a_2, b_2, *, eps=1e-6, tile_rows=None):
    """LayerNorm(x + sublayer_out) for an arbitrary (precomputed) sublayer output."""
    B, S, D = x.shape
    rows = B * S
    itemsize = jnp.dtype(x.dtype).itemsize
    mult = max(8, 32 // max(itemsize, 1))              # sublane packing multiple
    vmem_limit, budget = _vmem_budget()
    if tile_rows is None:
        # 3 double-buffered row streams (x, sublayer_out, out) + ~6 f32 body temps per row.
        per_row = 3 * 2 * D * itemsize + 6 * D * 4
        resident = 2 * 2 * D * 4                       # a_2, b_2 (double-buffered)
        tile_rows, rows_p = _plan_tiles(rows, per_row, resident, mult, budget)
    else:
        rows_p = pl.cdiv(rows, tile_rows) * tile_rows

    x2 = _pad_rows(x.reshape(rows, D), rows_p)
    s2 = _pad_rows(sublayer_out.reshape(rows, D), rows_p)
    a2 = a_2.reshape(1, D).astype(jnp.float32)
    b2 = b_2.reshape(1, D).astype(jnp.float32)

    kernel = functools.partial(_resid_ln_kernel, eps=eps, feat=D)

    out = pl.pallas_call(
        kernel,
        out_shape=jax.ShapeDtypeStruct((rows_p, D), x.dtype),
        grid_spec=pltpu.PrefetchScalarGridSpec(
            num_scalar_prefetch=0,
            grid=(rows_p // tile_rows,),
            in_specs=[
                pl.BlockSpec((tile_rows, D), lambda i: (i, 0)),   # x rows
                pl.BlockSpec((tile_rows, D), lambda i: (i, 0)),   # sublayer(x) rows
                pl.BlockSpec((1, D), lambda i: (0, 0)),           # a_2 (gain)
                pl.BlockSpec((1, D), lambda i: (0, 0)),           # b_2 (bias)
            ],
            out_specs=pl.BlockSpec((tile_rows, D), lambda i: (i, 0)),
        ),
        compiler_params=pltpu.CompilerParams(
            dimension_semantics=("parallel",),
            vmem_limit_bytes=vmem_limit,
        ),
    )(x2, s2, a2, b2)
    if rows_p != rows:
        out = out[:rows]
    return out.reshape(B, S, D)


def sublayer_connection_fused_linear(x, W, bias, a_2, b_2, *, eps=1e-6, tile_rows=None):
    """LayerNorm(x + (x @ W + bias)) with the sublayer matmul fused onto the MXU.

    Prefer this path when the sublayer is (or ends in) a matmul whose weight fits
    VMEM: it removes a full HBM write+read of sublayer_out (~33% less traffic on a
    memory-bound op) versus the general path.
    TODO(synk): for D large enough that W does not fit VMEM, add a K-tiled inner
    loop with an f32 accumulator instead of falling back to the general path.
    """
    B, S, D = x.shape
    rows = B * S
    itemsize = jnp.dtype(x.dtype).itemsize
    mult = max(8, 32 // max(itemsize, 1))
    vmem_limit, budget = _vmem_budget()

    w_bf16 = W.astype(jnp.bfloat16)                    # bf16-native MXU; halves W's VMEM
    param_bytes = 2 * (D * D * 2 + 3 * D * 4)          # double-buffered W + bias/a_2/b_2
    if tile_rows is None:
        # 2 double-buffered row streams (x, out) + ~8 f32 body temps per row
        # (x upcast, bf16 cast, matmul result, y, diff, result, broadcasts).
        per_row = 2 * 2 * D * itemsize + 8 * D * 4
        tile_rows, rows_p = _plan_tiles(rows, per_row, param_bytes, mult, budget)
    else:
        rows_p = pl.cdiv(rows, tile_rows) * tile_rows

    x2 = _pad_rows(x.reshape(rows, D), rows_p)
    bias2 = bias.reshape(1, D).astype(jnp.float32)
    a2 = a_2.reshape(1, D).astype(jnp.float32)
    b2 = b_2.reshape(1, D).astype(jnp.float32)

    kernel = functools.partial(_fused_linear_resid_ln_kernel, eps=eps, feat=D)

    out = pl.pallas_call(
        kernel,
        out_shape=jax.ShapeDtypeStruct((rows_p, D), x.dtype),
        grid_spec=pltpu.PrefetchScalarGridSpec(
            num_scalar_prefetch=0,
            grid=(rows_p // tile_rows,),
            in_specs=[
                pl.BlockSpec((tile_rows, D), lambda i: (i, 0)),   # x rows
                pl.BlockSpec((D, D), lambda i: (0, 0)),           # W (resident, bf16)
                pl.BlockSpec((1, D), lambda i: (0, 0)),           # sublayer bias
                pl.BlockSpec((1, D), lambda i: (0, 0)),           # a_2 (gain)
                pl.BlockSpec((1, D), lambda i: (0, 0)),           # b_2 (bias)
            ],
            out_specs=pl.BlockSpec((tile_rows, D), lambda i: (i, 0)),
        ),
        compiler_params=pltpu.CompilerParams(
            dimension_semantics=("parallel",),
            vmem_limit_bytes=vmem_limit,
        ),
    )(x2, w_bf16, bias2, a2, b2)
    if rows_p != rows:
        out = out[:rows]
    return out.reshape(B, S, D)


# --------------------------------------------------------------------------- demo

if __name__ == "__main__":
    # Small shapes implied by the module: (batch, seq, hidden) with hidden = `size`.
    # hidden=128 keeps the feature/lane axis lane-dense (multiple of 128).
    B, S, D = 2, 8, 128
    key = jax.random.PRNGKey(0)
    kx, kw, kb = jax.random.split(key, 3)

    x = jax.random.normal(kx, (B, S, D), dtype=jnp.float32)

    # LayerNorm parameters, per nn.Parameter init in __init__.
    a_2 = jnp.ones((D,), dtype=jnp.float32)
    b_2 = jnp.zeros((D,), dtype=jnp.float32)

    # `sublayer` is an arbitrary callable in forward(); model it as a small linear
    # layer.  Path 1 computes it in plain JAX (general), path 2 fuses it into the kernel.
    W = jax.random.normal(kw, (D, D), dtype=jnp.float32) * 0.05
    bias = jax.random.normal(kb, (D,), dtype=jnp.float32) * 0.05

    sublayer_out = x @ W + bias

    out_general = sublayer_connection(x, sublayer_out, a_2, b_2, eps=1e-6)
    out_fused = sublayer_connection_fused_linear(x, W, bias, a_2, b_2, eps=1e-6)
    jax.block_until_ready((out_general, out_fused))

    # Reference check (pure JAX, mirrors the PyTorch math incl. unbiased std and eps-on-std).
    y = x + sublayer_out
    mean = jnp.mean(y, axis=-1, keepdims=True)
    diff = y - mean
    std = jnp.sqrt(jnp.sum(diff * diff, axis=-1, keepdims=True) / (D - 1))
    ref = a_2 * diff / (std + 1e-6) + b_2

    assert jnp.allclose(out_general, ref, atol=1e-5, rtol=1e-5), "general path mismatch"
    # Fused path uses a bf16 MXU matmul (f32 accumulation) -> slightly looser tolerance.
    assert jnp.allclose(out_fused, ref, atol=2e-2, rtol=2e-2), "fused path mismatch"

    print("KERNEL_OK")
</pallas_src>

<mosaic_0001>
module attributes {stable_mosaic.version = 11 : i64} {
  func.func @_resid_ln_kernel(%arg0: i32, %arg1: memref<8x128xf32, #tpu.memory_space<vmem>>, %arg2: memref<8x128xf32, #tpu.memory_space<vmem>>, %arg3: memref<1x128xf32, #tpu.memory_space<vmem>>, %arg4: memref<1x128xf32, #tpu.memory_space<vmem>>, %arg5: memref<8x128xf32, #tpu.memory_space<vmem>>) attributes {dimension_semantics = [#tpu.dimension_semantics<parallel>], iteration_bounds = array<i64: 2>, scalar_prefetch = 0 : i64, scratch_operands = 0 : i64, tpu.core_type = #tpu.core_type<tc>, window_params = [{transform_indices = @transform_0, window_bounds = array<i64: 8, 128>}, {transform_indices = @transform_1, window_bounds = array<i64: 8, 128>}, {pipeline_mode = #tpu.pipeline_mode<synchronous>, transform_indices = @transform_2, window_bounds = array<i64: 1, 128>}, {pipeline_mode = #tpu.pipeline_mode<synchronous>, transform_indices = @transform_3, window_bounds = array<i64: 1, 128>}, {transform_indices = @transform_4, window_bounds = array<i64: 8, 128>}]} {
    %c0 = arith.constant 0 : index
    %c0_0 = arith.constant 0 : index
    %0 = vector.load %arg1[%c0, %c0_0] : memref<8x128xf32, #tpu.memory_space<vmem>>, vector<8x128xf32>
    %c0_1 = arith.constant 0 : index
    %c0_2 = arith.constant 0 : index
    %1 = vector.load %arg2[%c0_1, %c0_2] : memref<8x128xf32, #tpu.memory_space<vmem>>, vector<8x128xf32>
    %2 = arith.addf %0, %1 : vector<8x128xf32>
    %c0_3 = arith.constant 0 : index
    %c0_4 = arith.constant 0 : index
    %3 = vector.load %arg3[%c0_3, %c0_4] : memref<1x128xf32, #tpu.memory_space<vmem>>, vector<1x128xf32>
    %c0_5 = arith.constant 0 : index
    %c0_6 = arith.constant 0 : index
    %4 = vector.load %arg4[%c0_5, %c0_6] : memref<1x128xf32, #tpu.memory_space<vmem>>, vector<1x128xf32>
    %cst = arith.constant dense<0.000000e+00> : vector<8xf32>
    %5 = vector.multi_reduction <add>, %2, %cst [1] : vector<8x128xf32> to vector<8xf32>
    %6 = vector.shape_cast %5 : vector<8xf32> to vector<8x1xf32>
    %cst_7 = arith.constant 1.280000e+02 : f32
    %7 = vector.broadcast %cst_7 : f32 to vector<8x1xf32>
    %8 = arith.divf %6, %7 : vector<8x1xf32>
    %9 = vector.broadcast %8 : vector<8x1xf32> to vector<8x128xf32>
    %10 = arith.subf %2, %9 : vector<8x128xf32>
    %11 = arith.mulf %10, %10 : vector<8x128xf32>
    %cst_8 = arith.constant dense<0.000000e+00> : vector<8xf32>
    %12 = vector.multi_reduction <add>, %11, %cst_8 [1] : vector<8x128xf32> to vector<8xf32>
    %13 = vector.shape_cast %12 : vector<8xf32> to vector<8x1xf32>
    %cst_9 = arith.constant 0.00787401571 : f32
    %14 = vector.broadcast %cst_9 : f32 to vector<8x1xf32>
    %15 = arith.mulf %13, %14 : vector<8x1xf32>
    %16 = math.sqrt %15 : vector<8x1xf32>
    %cst_10 = arith.constant 9.99999997E-7 : f32
    %17 = vector.broadcast %cst_10 : f32 to vector<8x1xf32>
    %18 = arith.addf %16, %17 : vector<8x1xf32>
    %19 = tpu.reciprocal %18 : vector<8x1xf32> -> vector<8x1xf32>
    %20 = vector.broadcast %19 : vector<8x1xf32> to vector<8x128xf32>
    %21 = arith.mulf %10, %20 : vector<8x128xf32>
    %22 = vector.broadcast %3 : vector<1x128xf32> to vector<8x128xf32>
    %23 = arith.mulf %21, %22 : vector<8x128xf32>
    %24 = vector.broadcast %4 : vector<1x128xf32> to vector<8x128xf32>
    %25 = arith.addf %23, %24 : vector<8x128xf32>
    %c0_11 = arith.constant 0 : index
    %c0_12 = arith.constant 0 : index
    %26 = vector.load %arg5[%c0_11, %c0_12] : memref<8x128xf32, #tpu.memory_space<vmem>>, vector<8x128xf32>
    tpu.vector_store %arg5[%c0_11, %c0_12], %25 {strides = array<i32>} : memref<8x128xf32, #tpu.memory_space<vmem>>, vector<8x128xf32>,
    return
  }
  func.func @transform_0(%arg0: i32) -> (i32, i32) {
    %c0_i32 = arith.constant 0 : i32
    %c0_i32_0 = arith.constant 0 : i32
    return %arg0, %c0_i32 : i32, i32
  }
  func.func @transform_1(%arg0: i32) -> (i32, i32) {
    %c0_i32 = arith.constant 0 : i32
    %c0_i32_0 = arith.constant 0 : i32
    return %arg0, %c0_i32 : i32, i32
  }
  func.func @transform_2(%arg0: i32) -> (i32, i32) {
    %c0_i32 = arith.constant 0 : i32
    %c0_i32_0 = arith.constant 0 : i32
    %c0_i32_1 = arith.constant 0 : i32
    return %c0_i32, %c0_i32_0 : i32, i32
  }
  func.func @transform_3(%arg0: i32) -> (i32, i32) {
    %c0_i32 = arith.constant 0 : i32
    %c0_i32_0 = arith.constant 0 : i32
    %c0_i32_1 = arith.constant 0 : i32
    return %c0_i32, %c0_i32_0 : i32, i32
  }
  func.func @transform_4(%arg0: i32) -> (i32, i32) {
    %c0_i32 = arith.constant 0 : i32
    %c0_i32_0 = arith.constant 0 : i32
    return %arg0, %c0_i32 : i32, i32
  }
}

</mosaic_0001>

<llo_original>
// kernel: tpu_custom_call.1
$region0: #{tpu_custom_call.1}
  #allocation0 [shape = 'u32[]', space=smem, size = 0x4, offset = 0x4, fixed_abs, tag = 'smem constant byte address 0x4 - core index']
  #allocation1 [shape = 'u32[72,128]{1,0:T(1,128)}', space=vmem, size = 0x9000, scoped, tag = 'internal scratch']
  %s0 = inlined_call_operand.hbm [shape: f32[16,128], index: 0, kind: input, shape index: {}]
  %s1 = inlined_call_operand.hbm [shape: f32[16,128], index: 1, kind: input, shape index: {}]
  %s2 = inlined_call_operand.vmem [shape: f32[1,128], index: 2, kind: input, shape index: {}]
  %s3 = inlined_call_operand.vmem [shape: f32[1,128], index: 3, kind: input, shape index: {}]
  %s4 = inlined_call_operand.hbm [shape: f32[16,128], index: 4, kind: output, shape index: {}]
  %s5 = sld [smem:[#allocation0]]
  $region57: #{tpu_custom_call.1} parent=0
    _
  %s7 = ssub.s32 1, %s5
  %s8 = scalar_select 0, %s7, %s5
  $region1: #{tpu_custom_call.1} parent=0
    #allocation2 [shape = 'u8[8192]{0}', space=vmem, size = 0x2000, scoped, tag = 'input window, operand 0']
    #allocation3 [shape = 's32[2]{0}', space=sflag, size = 0x8, scoped, tag = 'scoped memory for tpu_custom_call.1']
    #allocation4 [shape = 's32[2]{0}', space=sflag, size = 0x8, scoped, tag = 'scoped memory for tpu_custom_call.1']
    #allocation5 [shape = 'u8[8192]{0}', space=vmem, size = 0x2000, scoped, tag = 'input window, operand 1']
    #allocation6 [shape = 's32[2]{0}', space=sflag, size = 0x8, scoped, tag = 'scoped memory for tpu_custom_call.1']
    #allocation7 [shape = 'u8[8192]{0}', space=vmem, size = 0x2000, scoped, tag = 'output window, operand 0']
    %9 = vsyncpa [#allocation3], 0
    %s10 = scalar_lea.sflag [#allocation3], 1
    %11 = vsyncpa %s10, 0
    %12 = vsyncpa [#allocation6], 0
    %s13 = scalar_lea.sflag [#allocation6], 1
    %14 = vsyncpa %s13, 0
    %15 = vsyncpa [#allocation4], 0
    %s16 = scalar_lea.sflag [#allocation4], 1
    %17 = vsyncpa %s16, 0
    loop: start=0, step=1, limit=4
    $region2: #{tpu_custom_call.1} parent=1 // loop_pre_header
      _
    $region3: #{tpu_custom_call.1} parent=1 // loop_header
      %s19 = sphi 0, %s23
      %p20 = scmp.ge.s32.totalorder %s19, 4
      %s29 = sphi 0, %s31
      %s32 = sphi 0, %s29
      %s33 = sphi 0, %s32
      %s49 = sphi 0, %s33
      %s55 = sphi 0, %s57
      %s58 = sphi 0, %s55
      %s59 = sphi 0, %s58
      %s75 = sphi 0, %s59
      %s79 = sphi 0, %s79
      %s81 = sphi 0, %s79
      %s82 = sphi 0, %s81
      %s96 = sphi 0, %s82
      %s100 = sphi 0, %s100
      %s102 = sphi 0, %s100
      %s103 = sphi 0, %s102
      %s117 = sphi 0, %s103
      %s123 = sphi 0, %s125
      %s126 = sphi 0, %s123
      %s127 = sphi 0, %s126
      %s143 = sphi 0, %s127
    $region4: #{tpu_custom_call.1} parent=1 // loop_header_branch
      %22 = sbr.rel (%p20) target = $region8
    $region5: #{tpu_custom_call.1} parent=1 // loop_body
      %s24 = ssub.s32 %s19, 1
      %s25 = ssub.s32 %s19, 2
      %s26 = sadd.s32 %s19, 1
      %s27 = ssub.s32 %s19, %s26
      %p28 = scmp.eq.s32.totalorder %s27, 0
      %s30 = sadd.s32 %s29, 1
      %s31 = scalar_select %p28, %s29, %s30
      %p34 = pneg %p28
      %p35 = scmp.eq.s32.totalorder %s19, 1
      %p36 = por %p34, %p35
      %p37 = scmp.ne.s32.totalorder %s29, %s32
      %p38 = scmp.eq.s32.totalorder %s19, 0
      %p39 = por %p37, %p38
      %p40 = scmp.ne.s32.totalorder %s29, %s32
      %p41 = scmp.eq.s32.totalorder %s24, 1
      %p42 = por %p40, %p41
      %p43 = scmp.ne.s32.totalorder %s32, %s33
      %p44 = scmp.eq.s32.totalorder %s24, 0
      %p45 = por %p43, %p44
      %p46 = scmp.ne.s32.totalorder %s32, %s33
      %p47 = scmp.eq.s32.totalorder %s25, 1
      %p48 = por %p46, %p47
      %p50 = scmp.ne.s32.totalorder %s33, %s49
      %p51 = scmp.eq.s32.totalorder %s25, 0
      %p52 = por %p50, %p51
      %s53 = ssub.s32 %s19, %s26
      %p54 = scmp.eq.s32.totalorder %s53, 0
      %s56 = sadd.s32 %s55, 1
      %s57 = scalar_select %p54, %s55, %s56
      %p60 = pneg %p54
      %p61 = scmp.eq.s32.totalorder %s19, 1
      %p62 = por %p60, %p61
      %p63 = scmp.ne.s32.totalorder %s55, %s58
      %p64 = scmp.eq.s32.totalorder %s19, 0
      %p65 = por %p63, %p64
      %p66 = scmp.ne.s32.totalorder %s55, %s58
      %p67 = scmp.eq.s32.totalorder %s24, 1
      %p68 = por %p66, %p67
      %p69 = scmp.ne.s32.totalorder %s58, %s59
      %p70 = scmp.eq.s32.totalorder %s24, 0
      %p71 = por %p69, %p70
      %p72 = scmp.ne.s32.totalorder %s58, %s59
      %p73 = scmp.eq.s32.totalorder %s25, 1
      %p74 = por %p72, %p73
      %p76 = scmp.ne.s32.totalorder %s59, %s75
      %p77 = scmp.eq.s32.totalorder %s25, 0
      %p78 = por %p76, %p77
      %s80 = sadd.s32 %s79, 1
      %p83 = scmp.eq.s32.totalorder %s19, 1
      %p84 = scmp.ne.s32.totalorder %s79, %s81
      %p85 = scmp.eq.s32.totalorder %s19, 0
      %p86 = por %p84, %p85
      %p87 = scmp.ne.s32.totalorder %s79, %s81
      %p88 = scmp.eq.s32.totalorder %s24, 1
      %p89 = por %p87, %p88
      %p90 = scmp.ne.s32.totalorder %s81, %s82
      %p91 = scmp.eq.s32.totalorder %s24, 0
      %p92 = por %p90, %p91
      %p93 = scmp.ne.s32.totalorder %s81, %s82
      %p94 = scmp.eq.s32.totalorder %s25, 1
      %p95 = por %p93, %p94
      %p97 = scmp.ne.s32.totalorder %s82, %s96
      %p98 = scmp.eq.s32.totalorder %s25, 0
      %p99 = por %p97, %p98
      %s101 = sadd.s32 %s100, 1
      %p104 = scmp.eq.s32.totalorder %s19, 1
      %p105 = scmp.ne.s32.totalorder %s100, %s102
      %p106 = scmp.eq.s32.totalorder %s19, 0
      %p107 = por %p105, %p106
      %p108 = scmp.ne.s32.totalorder %s100, %s102
      %p109 = scmp.eq.s32.totalorder %s24, 1
      %p110 = por %p108, %p109
      %p111 = scmp.ne.s32.totalorder %s102, %s103
      %p112 = scmp.eq.s32.totalorder %s24, 0
      %p113 = por %p111, %p112
      %p114 = scmp.ne.s32.totalorder %s102, %s103
      %p115 = scmp.eq.s32.totalorder %s25, 1
      %p116 = por %p114, %p115
      %p118 = scmp.ne.s32.totalorder %s103, %s117
      %p119 = scmp.eq.s32.totalorder %s25, 0
      %p120 = por %p118, %p119
      %s121 = ssub.s32 %s19, %s26
      %p122 = scmp.eq.s32.totalorder %s121, 0
      %s124 = sadd.s32 %s123, 1
      %s125 = scalar_select %p122, %s123, %s124
      %p128 = pneg %p122
      %p129 = scmp.eq.s32.totalorder %s19, 1
      %p130 = por %p128, %p129
      %p131 = scmp.ne.s32.totalorder %s123, %s126
      %p132 = scmp.eq.s32.totalorder %s19, 0
      %p133 = por %p131, %p132
      %p134 = scmp.ne.s32.totalorder %s123, %s126
      %p135 = scmp.eq.s32.totalorder %s24, 1
      %p136 = por %p134, %p135
      %p137 = scmp.ne.s32.totalorder %s126, %s127
      %p138 = scmp.eq.s32.totalorder %s24, 0
      %p139 = por %p137, %p138
      %p140 = scmp.ne.s32.totalorder %s126, %s127
      %p141 = scmp.eq.s32.totalorder %s25, 1
      %p142 = por %p140, %p141
      %p144 = scmp.ne.s32.totalorder %s127, %s143
      %p145 = scmp.eq.s32.totalorder %s25, 0
      %p146 = por %p144, %p145
      %p147 = scmp.le.s32.totalorder 1, %s19
      %p148 = scmp.lt.s32.totalorder %s19, 3
      %p149 = pnand %p147, %p148
      %p150 = pneg %p149
      // Predicated region
      $region9: #{tpu_custom_call.1} parent=5 // pred_check
        _
      $region10: #{tpu_custom_call.1} parent=5 // pred_check_branch
        %152 = sbr.rel (%p149) target = $region12
      $region11: #{tpu_custom_call.1} parent=5 // pred_region
        %s153 = ssub.s32 %s19, 1
        // Predicated region
        $region13: #{tpu_custom_call.1} parent=11 // pred_check
          %p154 = pneg %p92
        $region14: #{tpu_custom_call.1} parent=11 // pred_check_branch
          %156 = sbr.rel (%p154) target = $region16
        $region15: #{tpu_custom_call.1} parent=11 // pred_region
          _
        $region16: #{tpu_custom_call.1} parent=11 // pred_fallthru
          _
        // Predicated region
        $region17: #{tpu_custom_call.1} parent=11 // pred_check
          %p157 = pneg %p113
        $region18: #{tpu_custom_call.1} parent=11 // pred_check_branch
          %159 = sbr.rel (%p157) target = $region20
        $region19: #{tpu_custom_call.1} parent=11 // pred_region
          _
        $region20: #{tpu_custom_call.1} parent=11 // pred_fallthru
          _
      $region12: #{tpu_custom_call.1} parent=5 // pred_fallthru
        _
      %p160 = scmp.lt.s32.totalorder %s19, 2
      // Predicated region
      $region21: #{tpu_custom_call.1} parent=5 // pred_check
        %p161 = pneg %p160
      $region22: #{tpu_custom_call.1} parent=5 // pred_check_branch
        %163 = sbr.rel (%p161) target = $region24
      $region23: #{tpu_custom_call.1} parent=5 // pred_region
        // Predicated region
        $region25: #{tpu_custom_call.1} parent=23 // pred_check
          %p164 = pneg %p39
        $region26: #{tpu_custom_call.1} parent=23 // pred_check_branch
          %166 = sbr.rel (%p164) target = $region28
        $region27: #{tpu_custom_call.1} parent=23 // pred_region
          %s167 = sand.u32 %s29, 1
          %s168 = scalar_lea.sflag [#allocation3], %s167
          %s169 = sand.u32 %s29, 1
          %s170 = smul.addr %s169, 8
          %s171 = scalar_lea.vmem [#allocation2], %s170
          %173 = vsyncadd %s168, 0
          %s174 = smul.addr %s19, 8
          %s175 = scalar_lea.hbm %s0, %s174
          %s177 = sshll.u32 %s175, 4
          %s178 = int_to_ptr.hbm [resolvable:$true] %s177
          %s179 = sshll.u32 %s171, 4
          %s180 = int_to_ptr.vmem [resolvable:$true] %s179
          %182 = dma.hbm_to_vmem [thread:$0]  %s178, 128, %s180, %s168
        $region28: #{tpu_custom_call.1} parent=23 // pred_fallthru
          _
        // Predicated region
        $region29: #{tpu_custom_call.1} parent=23 // pred_check
          %p183 = pneg %p65
        $region30: #{tpu_custom_call.1} parent=23 // pred_check_branch
          %185 = sbr.rel (%p183) target = $region32
        $region31: #{tpu_custom_call.1} parent=23 // pred_region
          %s186 = sand.u32 %s55, 1
          %s187 = scalar_lea.sflag [#allocation6], %s186
          %s188 = sand.u32 %s55, 1
          %s189 = smul.addr %s188, 8
          %s190 = scalar_lea.vmem [#allocation5], %s189
          %192 = vsyncadd %s187, 0
          %s193 = smul.addr %s19, 8
          %s194 = scalar_lea.hbm %s1, %s193
          %s196 = sshll.u32 %s194, 4
          %s197 = int_to_ptr.hbm [resolvable:$true] %s196
          %s198 = sshll.u32 %s190, 4
          %s199 = int_to_ptr.vmem [resolvable:$true] %s198
          %201 = dma.hbm_to_vmem [thread:$0]  %s197, 128, %s199, %s187
        $region32: #{tpu_custom_call.1} parent=23 // pred_fallthru
          _
      $region24: #{tpu_custom_call.1} parent=5 // pred_fallthru
        _
      %p202 = scmp.le.s32.totalorder 1, %s19
      %p203 = scmp.lt.s32.totalorder %s19, 3
      %p204 = pnand %p202, %p203
      %p205 = pneg %p204
      // Predicated region
      $region33: #{tpu_custom_call.1} parent=5 // pred_check
        _
      $region34: #{tpu_custom_call.1} parent=5 // pred_check_branch
        %207 = sbr.rel (%p204) target = $region36
      $region35: #{tpu_custom_call.1} parent=5 // pred_region
        %s208 = ssub.s32 %s19, 1
        %s209 = sand.u32 %s32, 1
        %s210 = scalar_lea.sflag [#allocation3], %s209
        %s211 = sand.u32 %s32, 1
        %s212 = smul.addr %s211, 8
        %s213 = scalar_lea.vmem [#allocation2], %s212
        // Predicated region
        $region37: #{tpu_custom_call.1} parent=35 // pred_check
          %p214 = pneg %p45
        $region38: #{tpu_custom_call.1} parent=35 // pred_check_branch
          %216 = sbr.rel (%p214) target = $region40
        $region39: #{tpu_custom_call.1} parent=35 // pred_region
          %218 = dma.done %s210, 128
        $region40: #{tpu_custom_call.1} parent=35 // pred_fallthru
          _
        %s219 = sand.u32 %s58, 1
        %s220 = scalar_lea.sflag [#allocation6], %s219
        %s221 = sand.u32 %s58, 1
        %s222 = smul.addr %s221, 8
        %s223 = scalar_lea.vmem [#allocation5], %s222
        // Predicated region
        $region41: #{tpu_custom_call.1} parent=35 // pred_check
          %p224 = pneg %p71
        $region42: #{tpu_custom_call.1} parent=35 // pred_check_branch
          %226 = sbr.rel (%p224) target = $region44
        $region43: #{tpu_custom_call.1} parent=35 // pred_region
          %228 = dma.done %s220, 128
        $region44: #{tpu_custom_call.1} parent=35 // pred_fallthru
          _
        %s229 = sand.u32 %s32, 1
        %s230 = scalar_lea.sflag [#allocation3], %s229
        %s231 = sand.u32 %s32, 1
        %s232 = smul.addr %s231, 8
        %s233 = scalar_lea.vmem [#allocation2], %s232
        %p234 = pneg %p45
        %p235 = pneg %p42
        %s236 = sand.u32 %s58, 1
        %s237 = scalar_lea.sflag [#allocation6], %s236
        %s238 = sand.u32 %s58, 1
        %s239 = smul.addr %s238, 8
        %s240 = scalar_lea.vmem [#allocation5], %s239
        %p241 = pneg %p71
        %p242 = pneg %p68
        %p243 = pneg %p92
        %p244 = pneg %p89
        %p245 = pneg %p113
        %p246 = pneg %p110
        %p247 = pneg %p139
        %p248 = pneg %p136
        %s249 = sand.u32 %s126, 1
        %s250 = scalar_lea.sflag [#allocation4], %s249
        %s251 = sand.u32 %s126, 1
        %s252 = smul.addr %s251, 8
        %s253 = scalar_lea.vmem [#allocation7], %s252
        %v254 = vld [vmem:[%s213] sm:$0xff]
        %v255 = vld [vmem:[%s223] sm:$0xff]
        %v256 = vadd.f32 %v254, %v255
        %v257 = vld [vmem:[%s2] sm:$0x1]
        %v258 = vld [vmem:[%s3] sm:$0x1]
        %259 = vadd.xlane.f32.xlu0 %v256
        %v260 = vpop.xlane.xlu0 %259
        %v261 = vrcp.pop 128.0
        %v262 = vmul.f32 128.0, %v261
        %v263 = vsub.f32 1.0, %v262
        %v264 = vmul.f32 %v261, %v263
        %v265 = vadd.f32 %v261, %v264
        %vm266 = vweird.f32 %v261
        %v267 = vsel %vm266, %v261, %v265
        %v268 = vmul.f32 %v260, %v267
        %v269 = vsub.f32 %v256, %v268
        %v270 = vmul.f32 %v269, %v269
        %271 = vadd.xlane.f32.xlu0 %v270
        %v272 = vpop.xlane.xlu0 %271
        %v273 = vmul.f32 %v272, 0.007874016
        %v274 = vrsqrt.pop %v273
        %v275 = vmul.f32 %v274, %v273
        %v276 = vmul.f32 %v275, %v274
        %v277 = vmul.f32 0.5, %v276
        %v278 = vsub.f32 1.5, %v277
        %v279 = vmul.f32 %v274, %v278
        %v280 = vmul.f32 %v273, %v279
        %vm281 = vcmp.eq.f32.partialorder %v273, inf
        %v282 = vsel %vm281, %v273, %v280
        %vm283 = vcmp.eq.f32.partialorder %v273, 0.0
        %v284 = vand.u32 %v273, 2147483648
        %v285 = vsel %vm283, %v284, %v282
        %v286 = vadd.f32 %v285, 1e-06
        %v287 = vrcp.pop %v286
        %v288 = vmul.f32 %v286, %v287
        %v289 = vsub.f32 1.0, %v288
        %v290 = vmul.f32 %v287, %v289
        %v291 = vadd.f32 %v287, %v290
        %vm292 = vweird.f32 %v286
        %vm293 = vweird.f32 %v287
        %vm294 = vmor %vm292, %vm293
        %v295 = vsel %vm294, %v287, %v291
        %v296 = vand.u32 2147483647, %v286
        %vm297 = vcmp.eq.f32.partialorder %v296, 8.507059e+37
        %v298 = vand.u32 %v286, 2147483648
        %v299 = vor.u32 1.1754944e-38, %v298
        %v300 = vsel %vm297, %v299, %v295
        %v301 = vmul.f32 %v269, %v300
        %v303 = vperm.slane %v257, 0
        %v305 = vmul.f32 %v301, %v303
        %v307 = vperm.slane %v258, 0
        %v309 = vadd.f32 %v305, %v307
        %310 = vst [vmem:[%s253] sm:$0xff] %v309
        %s311 = sand.u32 %s126, 1
        %s312 = scalar_lea.sflag [#allocation4], %s311
        %s313 = sand.u32 %s126, 1
        %s314 = smul.addr %s313, 8
        %s315 = scalar_lea.vmem [#allocation7], %s314
        // Predicated region
        $region45: #{tpu_custom_call.1} parent=35 // pred_check
          %p316 = pneg %p136
        $region46: #{tpu_custom_call.1} parent=35 // pred_check_branch
          %318 = sbr.rel (%p316) target = $region48
        $region47: #{tpu_custom_call.1} parent=35 // pred_region
          %320 = vsyncadd %s312, 0
          %s321 = smul.addr %s24, 8
          %s322 = scalar_lea.hbm %s4, %s321
          %s324 = sshll.u32 %s315, 4
          %s325 = int_to_ptr.vmem [resolvable:$true] %s324
          %s326 = sshll.u32 %s322, 4
          %s327 = int_to_ptr.hbm [resolvable:$true] %s326
          %329 = dma.vmem_to_hbm [thread:$0]  %s325, 128, %s327, %s312
        $region48: #{tpu_custom_call.1} parent=35 // pred_fallthru
          _
      $region36: #{tpu_custom_call.1} parent=5 // pred_fallthru
        _
      %p330 = scmp.le.s32.totalorder 2, %s19
      // Predicated region
      $region49: #{tpu_custom_call.1} parent=5 // pred_check
        %p331 = pneg %p330
      $region50: #{tpu_custom_call.1} parent=5 // pred_check_branch
        %333 = sbr.rel (%p331) target = $region52
      $region51: #{tpu_custom_call.1} parent=5 // pred_region
        %s334 = ssub.s32 %s19, 2
        // Predicated region
        $region53: #{tpu_custom_call.1} parent=51 // pred_check
          %p335 = pneg %p142
        $region54: #{tpu_custom_call.1} parent=51 // pred_check_branch
          %337 = sbr.rel (%p335) target = $region56
        $region55: #{tpu_custom_call.1} parent=51 // pred_region
          %s338 = sand.u32 %s127, 1
          %s339 = scalar_lea.sflag [#allocation4], %s338
          %s340 = sand.u32 %s127, 1
          %s341 = smul.addr %s340, 8
          %s342 = scalar_lea.vmem [#allocation7], %s341
          %344 = dma.done %s339, 128
        $region56: #{tpu_custom_call.1} parent=51 // pred_fallthru
          _
      $region52: #{tpu_custom_call.1} parent=5 // pred_fallthru
        _
    $region6: #{tpu_custom_call.1} parent=1 // loop_footer
      %s23 = sadd.s32 1, %s19
    $region7: #{tpu_custom_call.1} parent=1 // loop_footer_branch
      %18 = sbr.rel target = $region3
    $region8: #{tpu_custom_call.1} parent=1 // loop_exit
      _
    %345 = vsyncpa [#allocation3], 1
    %s346 = scalar_lea.sflag [#allocation3], 1
    %347 = vsyncpa %s346, 1
    %348 = vsyncpa [#allocation6], 1
    %s349 = scalar_lea.sflag [#allocation6], 1
    %350 = vsyncpa %s349, 1
    %351 = vsyncpa [#allocation4], 1
    %s352 = scalar_lea.sflag [#allocation4], 1
    %353 = vsyncpa %s352, 1

</llo_original>
